<compile_context>
chip_gen: v5e
topology: v5e:2x2
jax: 0.10.0
libtpu: 0.0.40
codegen_flags: <defaults>
</compile_context>

<pallas_src>
import math

import jax
import jax.numpy as jnp
from jax import lax
from jax.experimental import pallas as pl
from jax.experimental.pallas import tpu as pltpu


# ------------------------------- tiling ------------------------------------

def _pick_tile(dim, target, align):
    """Largest multiple of `align` that divides `dim` and is <= `target`.

    Falls back to the full dim (always a legal block size).  Refuses loudly
    for huge awkward dims instead of silently blowing VMEM.
    """
    if dim <= target:
        return dim
    t = (target // align) * align
    while t >= align:
        if dim % t == 0:
            return t
        t -= align
    if dim > 4096:
        raise ValueError(
            f"no aligned tile for dim={dim}; pad it to a multiple of {align}")
    # TODO(synk): remainder-tile handling / input padding for awkward dims.
    return dim


# ------------------------------ projection ----------------------------------
# x:(B,S,E) @ w:(E,N) + b:(1,N) -> (B,S,N).
# Grid (B, S/tm, N/tn, E/tk); f32 VMEM accumulator across the E (reduction)
# axis.  Heads are NOT split here -> x is not re-read per head and the MXU
# gets a lane-dense N tile (up to 256 columns).

def _linear_kernel(x_ref, w_ref, b_ref, o_ref, acc_ref):
    @pl.when(pl.program_id(3) == 0)
    def _init():
        acc_ref[...] = jnp.zeros_like(acc_ref)

    acc_ref[...] += jnp.dot(x_ref[0], w_ref[...],
                            preferred_element_type=jnp.float32)

    @pl.when(pl.program_id(3) == pl.num_programs(3) - 1)
    def _finalize():
        o_ref[0] = (acc_ref[...] + b_ref[...]).astype(o_ref.dtype)


def linear(x, w, b, *, tm_target=256, tn_target=256, tk_target=512):
    """x: (B,S,E), w: (E,N), b: (1,N) -> (B,S,N)."""
    B, S, E = x.shape
    N = w.shape[1]
    tm = _pick_tile(S, tm_target, 8)      # rows: multiple of 8 or full
    tn = _pick_tile(N, tn_target, 128)    # output cols: mult of 128 or full
    tk = _pick_tile(E, tk_target, 128)    # reduction: mult of 128 or full
    grid = (B, S // tm, N // tn, E // tk)
    return pl.pallas_call(
        _linear_kernel,
        out_shape=jax.ShapeDtypeStruct((B, S, N), x.dtype),
        grid_spec=pltpu.PrefetchScalarGridSpec(
            num_scalar_prefetch=0,
            grid=grid,
            in_specs=[
                pl.BlockSpec((1, tm, tk), lambda b_, si, ni, ki: (b_, si, ki)),
                pl.BlockSpec((tk, tn), lambda b_, si, ni, ki: (ki, ni)),
                pl.BlockSpec((1, tn), lambda b_, si, ni, ki: (0, ni)),
            ],
            out_specs=pl.BlockSpec((1, tm, tn),
                                   lambda b_, si, ni, ki: (b_, si, ni)),
            scratch_shapes=[pltpu.VMEM((tm, tn), jnp.float32)],
        ),
        compiler_params=pltpu.CompilerParams(
            dimension_semantics=("parallel", "parallel", "parallel",
                                 "arbitrary")),
    )(x, w, b)


# --------------------------- flash attention --------------------------------
# Grid (B, H, Sq/tq, Sk/tk); running max / sum / f32 accumulator in VMEM
# scratch; the KV axis is the "arbitrary" accumulator axis.  Blocks are
# always (1, tq_or_tk, D) so the same kernel body serves both layouts.

def _flash_kernel(q_ref, k_ref, v_ref, o_ref, m_ref, l_ref, acc_ref):
    kv = pl.program_id(3)

    @pl.when(kv == 0)
    def _init():
        m_ref[...] = jnp.full_like(m_ref, -jnp.inf)
        l_ref[...] = jnp.zeros_like(l_ref)
        acc_ref[...] = jnp.zeros_like(acc_ref)

    q = q_ref[0]                      # (tq, D); 1/sqrt(D) folded into Q proj
    k = k_ref[0]                      # (tk, D)
    v = v_ref[0]                      # (tk, D)

    # Scores: contract the D axis of both operands (no materialized K^T).
    s = lax.dot_general(q, k, (((1,), (1,)), ((), ())),
                        preferred_element_type=jnp.float32)     # (tq, tk)

    m_prev = m_ref[...]
    m_new = jnp.maximum(m_prev, jnp.max(s, axis=-1, keepdims=True))
    alpha = jnp.exp(m_prev - m_new)
    p = jnp.exp(s - m_new)
    l_ref[...] = alpha * l_ref[...] + jnp.sum(p, axis=-1, keepdims=True)
    acc_ref[...] = alpha * acc_ref[...] + jnp.dot(
        p.astype(v.dtype), v, preferred_element_type=jnp.float32)
    m_ref[...] = m_new

    @pl.when(kv == pl.num_programs(3) - 1)
    def _finalize():
        # Exact division once per Q tile (parity with the reference).
        o_ref[0] = (acc_ref[...] / l_ref[...]).astype(o_ref.dtype)


def _flash_call(q_arr, k_arr, v_arr, *, grid, in_specs, out_spec, out_shape,
                tq, head_dim):
    return pl.pallas_call(
        _flash_kernel,
        out_shape=out_shape,
        grid_spec=pltpu.PrefetchScalarGridSpec(
            num_scalar_prefetch=0,
            grid=grid,
            in_specs=in_specs,
            out_specs=out_spec,
            scratch_shapes=[
                pltpu.VMEM((tq, 1), jnp.float32),          # running max
                pltpu.VMEM((tq, 1), jnp.float32),          # running sum
                pltpu.VMEM((tq, head_dim), jnp.float32),   # f32 accumulator
            ],
        ),
        compiler_params=pltpu.CompilerParams(
            dimension_semantics=("parallel", "parallel", "parallel",
                                 "arbitrary")),
    )(q_arr, k_arr, v_arr)


def flash_attention_packed(q_arr, k_arr, v_arr, *, n_heads, head_dim,
                           q_off, k_off, v_off,
                           tq_target=512, tk_target=512):
    """Heads sliced straight out of packed (B, S, {E|3E}) projections and the
    output written straight into (B, Sq, E).  Requires head_dim % 128 == 0
    (lane-dense last block dim).  *_off are head-block offsets along the
    packed last axis (e.g. fused QKV: q=0, k=H, v=2H)."""
    B, Sq, _ = q_arr.shape
    Sk = k_arr.shape[1]
    H, D = n_heads, head_dim
    tq = _pick_tile(Sq, tq_target, 8)
    tk = _pick_tile(Sk, tk_target, 8)
    grid = (B, H, Sq // tq, Sk // tk)

    def q_map(b, h, qi, ki, off=q_off):
        return (b, qi, off + h)

    def k_map(b, h, qi, ki, off=k_off):
        return (b, ki, off + h)

    def v_map(b, h, qi, ki, off=v_off):
        return (b, ki, off + h)

    def o_map(b, h, qi, ki):
        return (b, qi, h)

    return _flash_call(
        q_arr, k_arr, v_arr,
        grid=grid,
        in_specs=[pl.BlockSpec((1, tq, D), q_map),
                  pl.BlockSpec((1, tk, D), k_map),
                  pl.BlockSpec((1, tk, D), v_map)],
        out_spec=pl.BlockSpec((1, tq, D), o_map),
        out_shape=jax.ShapeDtypeStruct((B, Sq, H * D), q_arr.dtype),
        tq=tq, head_dim=D)


def flash_attention_heads(q, k, v, *, batch, n_heads,
                          tq_target=512, tk_target=512):
    """Fallback for head_dim not a multiple of 128: inputs/outputs are
    head-major (B*H, S, D) activations (last block dim = full D, legal)."""
    BH, Sq, D = q.shape
    Sk = k.shape[1]
    B, H = batch, n_heads
    tq = _pick_tile(Sq, tq_target, 8)
    tk = _pick_tile(Sk, tk_target, 8)
    grid = (B, H, Sq // tq, Sk // tk)

    def q_map(b, h, qi, ki):
        return (b * H + h, qi, 0)

    def kv_map(b, h, qi, ki):
        return (b * H + h, ki, 0)

    return _flash_call(
        q, k, v,
        grid=grid,
        in_specs=[pl.BlockSpec((1, tq, D), q_map),
                  pl.BlockSpec((1, tk, D), kv_map),
                  pl.BlockSpec((1, tk, D), kv_map)],
        out_spec=pl.BlockSpec((1, tq, D), q_map),
        out_shape=jax.ShapeDtypeStruct((BH, Sq, D), q.dtype),
        tq=tq, head_dim=D)


# ------------------------------- module ------------------------------------

class MultiHeadAttentionPallas:
    def __init__(self, n_embed, n_heads, dropout, key):
        assert n_embed % n_heads == 0
        self.n_embed = n_embed
        self.n_heads = n_heads
        self.head_dim = n_embed // n_heads
        self.scale = float(math.sqrt(self.head_dim))

        # Deterministic parameter init (PyTorch Linear-like uniform bound).
        bound = 1.0 / math.sqrt(n_embed)
        ks = jax.random.split(key, 8)
        u = lambda k, shape: jax.random.uniform(
            k, shape, jnp.float32, minval=-bound, maxval=bound)
        self.w_q, self.b_q = u(ks[0], (n_embed, n_embed)), u(ks[1], (n_embed,))
        self.w_k, self.b_k = u(ks[2], (n_embed, n_embed)), u(ks[3], (n_embed,))
        self.w_v, self.b_v = u(ks[4], (n_embed, n_embed)), u(ks[5], (n_embed,))
        # fc exists in the PyTorch module but forward() returns x (the head
        # concat) and discards fc's output, so fc is kept but never applied.
        # TODO(synk): confirm the discarded fc output is intended upstream.
        self.w_fc, self.b_fc = u(ks[6], (n_embed, n_embed)), u(ks[7], (n_embed,))

        # 1/sqrt(D) folded into the Q projection once at init (E*E weights)
        # instead of dividing the (S,S) score matrix every attention step.
        s = 1.0 / self.scale
        self.w_q_s = self.w_q * s
        self.b_q_s = (self.b_q * s).reshape(1, -1)
        self.b_k2 = self.b_k.reshape(1, -1)
        self.b_v2 = self.b_v.reshape(1, -1)
        # Fused QKV weight for self-attention: stream x from HBM once.
        self.w_qkv = jnp.concatenate([self.w_q_s, self.w_k, self.w_v], axis=1)
        self.b_qkv = jnp.concatenate([self.b_q_s, self.b_k2, self.b_v2],
                                     axis=1)

    def __call__(self, query, key, value):
        B, Sq, E = query.shape
        Sk = key.shape[1]
        H, D = self.n_heads, self.head_dim
        lane_dense = (D % 128 == 0)

        if (query is key) and (key is value):
            # Self-attention: one fused projection, x read from HBM once.
            qkv = linear(query, self.w_qkv, self.b_qkv)           # (B,Sq,3E)
            if lane_dense:
                # Per-head slices straight out of qkv; output written straight
                # into (B, Sq, E) -> no (B,H,S,D) materialization, no final
                # transpose.
                return flash_attention_packed(
                    qkv, qkv, qkv, n_heads=H, head_dim=D,
                    q_off=0, k_off=H, v_off=2 * H)
            Qp = qkv[..., :E]
            Kp = qkv[..., E:2 * E]
            Vp = qkv[..., 2 * E:]
        else:
            # Cross-attention: separate projections (inputs differ).
            Qp = linear(query, self.w_q_s, self.b_q_s)            # (B,Sq,E)
            Kp = linear(key, self.w_k, self.b_k2)                 # (B,Sk,E)
            Vp = linear(value, self.w_v, self.b_v2)               # (B,Sk,E)
            if lane_dense:
                return flash_attention_packed(
                    Qp, Kp, Vp, n_heads=H, head_dim=D,
                    q_off=0, k_off=0, v_off=0)

        # Fallback (head_dim not a multiple of 128, e.g. tiny test shapes):
        # split heads in XLA and run flash on (B*H, S, D) activations.
        def split_heads(x, S):
            return (x.reshape(B, S, H, D).transpose(0, 2, 1, 3)
                     .reshape(B * H, S, D))

        xh = flash_attention_heads(
            split_heads(Qp, Sq), split_heads(Kp, Sk), split_heads(Vp, Sk),
            batch=B, n_heads=H)                                   # (B*H,Sq,D)
        return (xh.reshape(B, H, Sq, D).transpose(0, 2, 1, 3)
                  .reshape(B, Sq, E))


# ----------------------------- reference + main ----------------------------

def _reference(mha, query, key, value):
    B, Sq, E = query.shape
    Sk = key.shape[1]
    H, D = mha.n_heads, mha.head_dim
    Q = query @ mha.w_q + mha.b_q
    K = key @ mha.w_k + mha.b_k
    V = value @ mha.w_v + mha.b_v
    Q = Q.reshape(B, Sq, H, D).transpose(0, 2, 1, 3)
    K = K.reshape(B, Sk, H, D).transpose(0, 2, 1, 3)
    V = V.reshape(B, Sk, H, D).transpose(0, 2, 1, 3)
    att = jnp.einsum("bhqd,bhkd->bhqk", Q, K) / mha.scale
    att = jax.nn.softmax(att, axis=-1)
    x = jnp.einsum("bhqk,bhkd->bhqd", att, V)
    return x.transpose(0, 2, 1, 3).reshape(B, Sq, E)


if __name__ == "__main__":
    root = jax.random.PRNGKey(0)
    k1, k2, k3, k4, k5, k6 = jax.random.split(root, 6)

    def check(out, ref, name):
        assert out.shape == ref.shape, f"{name}: shape {out.shape} vs {ref.shape}"
        err = float(jnp.max(jnp.abs(out - ref)))
        assert err < 2e-3, f"{name}: max abs err {err}"

    # --- small shapes (head_dim=8 -> fallback head-split path) -------------
    B, S, E, H = 2, 8, 32, 4
    mha = MultiHeadAttentionPallas(n_embed=E, n_heads=H, dropout=0.1, key=k1)
    x = jax.random.normal(k2, (B, S, E), jnp.float32)
    out = jax.block_until_ready(mha(x, x, x))              # fused-QKV path
    check(out, _reference(mha, x, x, x), "self-attn small")

    q = jax.random.normal(k3, (B, S, E), jnp.float32)
    kk = jax.random.normal(k4, (B, S, E), jnp.float32)
    vv = jax.random.normal(k5, (B, S, E), jnp.float32)
    out = jax.block_until_ready(mha(q, kk, vv))            # cross-attn path
    check(out, _reference(mha, q, kk, vv), "cross-attn small")

    # --- lane-dense shapes (head_dim=128 -> packed no-transpose path) ------
    B2, S2, E2, H2 = 2, 128, 256, 2
    mha2 = MultiHeadAttentionPallas(n_embed=E2, n_heads=H2, dropout=0.1,
                                    key=k6)
    x2 = jax.random.normal(k2, (B2, S2, E2), jnp.float32)
    out2 = jax.block_until_ready(mha2(x2, x2, x2))
    check(out2, _reference(mha2, x2, x2, x2), "self-attn lane-dense")

    print("KERNEL_OK")
</pallas_src>

<mosaic_0001>
module attributes {stable_mosaic.version = 11 : i64} {
  func.func @_linear_kernel(%arg0: i32, %arg1: i32, %arg2: i32, %arg3: i32, %arg4: memref<1x8x32xf32, #tpu.memory_space<vmem>>, %arg5: memref<32x96xf32, #tpu.memory_space<vmem>>, %arg6: memref<1x96xf32, #tpu.memory_space<vmem>>, %arg7: memref<1x8x96xf32, #tpu.memory_space<vmem>>, %arg8: memref<8x96xf32, #tpu.memory_space<vmem>>) attributes {dimension_semantics = [#tpu.dimension_semantics<parallel>, #tpu.dimension_semantics<parallel>, #tpu.dimension_semantics<parallel>, #tpu.dimension_semantics<arbitrary>], iteration_bounds = array<i64: 2, 1, 1, 1>, scalar_prefetch = 0 : i64, scratch_operands = 1 : i64, tpu.core_type = #tpu.core_type<tc>, window_params = [{transform_indices = @transform_0, window_bounds = array<i64: 1, 8, 32>}, {transform_indices = @transform_1, window_bounds = array<i64: 32, 96>}, {transform_indices = @transform_2, window_bounds = array<i64: 1, 96>}, {transform_indices = @transform_3, window_bounds = array<i64: 1, 8, 96>}]} {
    %c0_i32 = arith.constant 0 : i32
    %0 = arith.cmpi eq, %arg3, %c0_i32 : i32
    %1 = arith.extui %0 : i1 to i32
    %c0_i32_0 = arith.constant 0 : i32
    %2 = arith.cmpi ne, %1, %c0_i32_0 : i32
    scf.if %2 {
      %cst_11 = arith.constant 0.000000e+00 : f32
      %13 = vector.broadcast %cst_11 : f32 to vector<8x96xf32>
      %c0_12 = arith.constant 0 : index
      %c0_13 = arith.constant 0 : index
      %14 = vector.load %arg8[%c0_12, %c0_13] : memref<8x96xf32, #tpu.memory_space<vmem>>, vector<8x96xf32>
      tpu.vector_store %arg8[%c0_12, %c0_13], %13 {strides = array<i32>} : memref<8x96xf32, #tpu.memory_space<vmem>>, vector<8x96xf32>,
    } else {
    }
    %c0 = arith.constant 0 : index
    %c0_1 = arith.constant 0 : index
    %3 = vector.load %arg8[%c0, %c0_1] : memref<8x96xf32, #tpu.memory_space<vmem>>, vector<8x96xf32>
    %c0_2 = arith.constant 0 : index
    %c0_3 = arith.constant 0 : index
    %c0_4 = arith.constant 0 : index
    %4 = vector.load %arg4[%c0_2, %c0_3, %c0_4] : memref<1x8x32xf32, #tpu.memory_space<vmem>>, vector<1x8x32xf32>
    %5 = vector.shape_cast %4 : vector<1x8x32xf32> to vector<8x32xf32>
    %c0_5 = arith.constant 0 : index
    %c0_6 = arith.constant 0 : index
    %6 = vector.load %arg5[%c0_5, %c0_6] : memref<32x96xf32, #tpu.memory_space<vmem>>, vector<32x96xf32>
    %cst = arith.constant dense<0.000000e+00> : vector<8x96xf32>
    %7 = tpu.matmul %5, %6, %cst {dimension_numbers = #tpu.dot_dimension_numbers<[1], [0], [0], [1], [0, 0, 1, 1], [], []>} : vector<8x32xf32>, vector<32x96xf32>, vector<8x96xf32> -> vector<8x96xf32>
    %8 = arith.addf %3, %7 : vector<8x96xf32>
    %c0_7 = arith.constant 0 : index
    %c0_8 = arith.constant 0 : index
    %9 = vector.load %arg8[%c0_7, %c0_8] : memref<8x96xf32, #tpu.memory_space<vmem>>, vector<8x96xf32>
    tpu.vector_store %arg8[%c0_7, %c0_8], %8 {strides = array<i32>} : memref<8x96xf32, #tpu.memory_space<vmem>>, vector<8x96xf32>,
    %c0_i32_9 = arith.constant 0 : i32
    %10 = arith.cmpi eq, %arg3, %c0_i32_9 : i32
    %11 = arith.extui %10 : i1 to i32
    %c0_i32_10 = arith.constant 0 : i32
    %12 = arith.cmpi ne, %11, %c0_i32_10 : i32
    scf.if %12 {
      %c0_11 = arith.constant 0 : index
      %c0_12 = arith.constant 0 : index
      %13 = vector.load %arg8[%c0_11, %c0_12] : memref<8x96xf32, #tpu.memory_space<vmem>>, vector<8x96xf32>
      %c0_13 = arith.constant 0 : index
      %c0_14 = arith.constant 0 : index
      %14 = vector.load %arg6[%c0_13, %c0_14] : memref<1x96xf32, #tpu.memory_space<vmem>>, vector<1x96xf32>
      %15 = vector.broadcast %14 : vector<1x96xf32> to vector<8x96xf32>
      %16 = arith.addf %13, %15 : vector<8x96xf32>
      %c0_15 = arith.constant 0 : index
      %c0_16 = arith.constant 0 : index
      %c0_17 = arith.constant 0 : index
      %17 = vector.load %arg7[%c0_15, %c0_16, %c0_17] : memref<1x8x96xf32, #tpu.memory_space<vmem>>, vector<1x8x96xf32>
      %18 = vector.shape_cast %17 : vector<1x8x96xf32> to vector<8x96xf32>
      %19 = vector.shape_cast %16 : vector<8x96xf32> to vector<1x8x96xf32>
      tpu.vector_store %arg7[%c0_15, %c0_16, %c0_17], %19 {strides = array<i32>} : memref<1x8x96xf32, #tpu.memory_space<vmem>>, vector<1x8x96xf32>,
    } else {
    }
    return
  }
  func.func @transform_0(%arg0: i32, %arg1: i32, %arg2: i32, %arg3: i32) -> (i32, i32, i32) {
    %c0_i32 = arith.constant 0 : i32
    return %arg0, %arg1, %arg3 : i32, i32, i32
  }
  func.func @transform_1(%arg0: i32, %arg1: i32, %arg2: i32, %arg3: i32) -> (i32, i32) {
    %c0_i32 = arith.constant 0 : i32
    return %arg3, %arg2 : i32, i32
  }
  func.func @transform_2(%arg0: i32, %arg1: i32, %arg2: i32, %arg3: i32) -> (i32, i32) {
    %c0_i32 = arith.constant 0 : i32
    %c0_i32_0 = arith.constant 0 : i32
    return %c0_i32, %arg2 : i32, i32
  }
  func.func @transform_3(%arg0: i32, %arg1: i32, %arg2: i32, %arg3: i32) -> (i32, i32, i32) {
    %c0_i32 = arith.constant 0 : i32
    return %arg0, %arg1, %arg2 : i32, i32, i32
  }
}

</mosaic_0001>

<llo_original>
// kernel: tpu_custom_call.1
$region0: #{tpu_custom_call.1}
  #allocation0 [shape = 'u32[]', space=smem, size = 0x4, offset = 0x4, fixed_abs, tag = 'smem constant byte address 0x4 - core index']
  #allocation1 [shape = 'u32[72,128]{1,0:T(1,128)}', space=vmem, size = 0x9000, scoped, tag = 'internal scratch']
  #allocation2 [shape = 'f32[8,96]{1,0:T(8,128)}', space=vmem, size = 0x1000, scoped, tag = 'scratch operand']
  %s0 = inlined_call_operand.hbm [shape: f32[2,8,32], index: 0, kind: input, shape index: {}]
  %s1 = inlined_call_operand.hbm [shape: f32[32,96], index: 1, kind: input, shape index: {}]
  %s2 = inlined_call_operand.vmem [shape: f32[1,96], index: 2, kind: input, shape index: {}]
  %s3 = inlined_call_operand.hbm [shape: f32[2,8,96], index: 3, kind: output, shape index: {}]
  %s4 = sld [smem:[#allocation0]]
  $region61: #{tpu_custom_call.1} parent=0
    _
  %s6 = ssub.s32 1, %s4
  %s7 = scalar_select 0, %s6, %s4
  $region1: #{tpu_custom_call.1} parent=0
    #allocation3 [shape = 'u8[8192]{0}', space=vmem, size = 0x2000, scoped, tag = 'input window, operand 0']
    #allocation4 [shape = 's32[2]{0}', space=sflag, size = 0x8, scoped, tag = 'scoped memory for tpu_custom_call.1']
    #allocation5 [shape = 's32[2]{0}', space=sflag, size = 0x8, scoped, tag = 'scoped memory for tpu_custom_call.1']
    #allocation6 [shape = 'u8[16384]{0}', space=vmem, size = 0x4000, scoped, tag = 'input window, operand 1, single buffered']
    #allocation7 [shape = 's32[1]{0}', space=sflag, size = 0x4, scoped, tag = 'scoped memory for tpu_custom_call.1']
    #allocation8 [shape = 'u8[8192]{0}', space=vmem, size = 0x2000, scoped, tag = 'output window, operand 0']
    %8 = vsyncpa [#allocation4], 0
    %s9 = scalar_lea.sflag [#allocation4], 1
    %10 = vsyncpa %s9, 0
    %11 = vsyncpa [#allocation7], 0
    %12 = vsyncpa [#allocation5], 0
    %s13 = scalar_lea.sflag [#allocation5], 1
    %14 = vsyncpa %s13, 0
    loop: start=0, step=1, limit=4
    $region2: #{tpu_custom_call.1} parent=1 // loop_pre_header
      _
    $region3: #{tpu_custom_call.1} parent=1 // loop_header
      %s16 = sphi 0, %s20
      %p17 = scmp.ge.s32.totalorder %s16, 4
      %s23 = sphi 0, %s49
      %s24 = sphi 0, %s45
      %s25 = sphi 0, %s41
      %s26 = sphi 0, %s37
      %s27 = sphi 0, %s23
      %s28 = sphi 0, %s24
      %s29 = sphi 0, %s25
      %s30 = sphi 0, %s26
      %s31 = sphi 0, %s27
      %s32 = sphi 0, %s28
      %s33 = sphi 0, %s29
      %s34 = sphi 0, %s30
      %s56 = sphi 0, %s58
      %s59 = sphi 0, %s56
      %s60 = sphi 0, %s59
      %s76 = sphi 0, %s60
      %s84 = sphi 0, %s86
      %s87 = sphi 0, %s84
      %s88 = sphi 0, %s87
      %s104 = sphi 0, %s88
      %s110 = sphi 0, %s112
      %s113 = sphi 0, %s110
      %s114 = sphi 0, %s113
      %s130 = sphi 0, %s114
      %s140 = sphi 0, %s142
      %s143 = sphi 0, %s140
      %s144 = sphi 0, %s143
      %s160 = sphi 0, %s144
    $region4: #{tpu_custom_call.1} parent=1 // loop_header_branch
      %19 = sbr.rel (%p17) target = $region8
    $region5: #{tpu_custom_call.1} parent=1 // loop_body
      %s21 = ssub.s32 %s16, 1
      %s22 = ssub.s32 %s16, 2
      %s35 = sadd.s32 1, %s26
      %p36 = scmp.ge.s32.totalorder %s35, 1
      %s37 = scalar_select %p36, 0, %s35
      %s38 = sadd.s32 1, %s25
      %s39 = scalar_select %p36, %s38, %s25
      %p40 = scmp.ge.s32.totalorder %s39, 1
      %s41 = scalar_select %p40, 0, %s39
      %s42 = sadd.s32 1, %s24
      %s43 = scalar_select %p40, %s42, %s24
      %p44 = scmp.ge.s32.totalorder %s43, 1
      %s45 = scalar_select %p44, 0, %s43
      %s46 = sadd.s32 1, %s23
      %s47 = scalar_select %p44, %s46, %s23
      %p48 = scmp.ge.s32.totalorder %s47, 2
      %s49 = scalar_select %p48, 0, %s47
      %s50 = ssub.s32 %s23, %s49
      %s51 = ssub.s32 %s24, %s45
      %s52 = sor.u32 %s50, %s51
      %s53 = ssub.s32 %s26, %s37
      %s54 = sor.u32 %s52, %s53
      %p55 = scmp.eq.s32.totalorder %s54, 0
      %s57 = sadd.s32 %s56, 1
      %s58 = scalar_select %p55, %s56, %s57
      %p61 = pneg %p55
      %p62 = scmp.eq.s32.totalorder %s16, 1
      %p63 = por %p61, %p62
      %p64 = scmp.ne.s32.totalorder %s56, %s59
      %p65 = scmp.eq.s32.totalorder %s16, 0
      %p66 = por %p64, %p65
      %p67 = scmp.ne.s32.totalorder %s56, %s59
      %p68 = scmp.eq.s32.totalorder %s21, 1
      %p69 = por %p67, %p68
      %p70 = scmp.ne.s32.totalorder %s59, %s60
      %p71 = scmp.eq.s32.totalorder %s21, 0
      %p72 = por %p70, %p71
      %p73 = scmp.ne.s32.totalorder %s59, %s60
      %p74 = scmp.eq.s32.totalorder %s22, 1
      %p75 = por %p73, %p74
      %p77 = scmp.ne.s32.totalorder %s60, %s76
      %p78 = scmp.eq.s32.totalorder %s22, 0
      %p79 = por %p77, %p78
      %s80 = ssub.s32 %s26, %s37
      %s81 = ssub.s32 %s25, %s41
      %s82 = sor.u32 %s80, %s81
      %p83 = scmp.eq.s32.totalorder %s82, 0
      %s85 = sadd.s32 %s84, 1
      %s86 = scalar_select %p83, %s84, %s85
      %p89 = pneg %p83
      %p90 = scmp.eq.s32.totalorder %s16, 1
      %p91 = por %p89, %p90
      %p92 = scmp.ne.s32.totalorder %s84, %s87
      %p93 = scmp.eq.s32.totalorder %s16, 0
      %p94 = por %p92, %p93
      %p95 = scmp.ne.s32.totalorder %s84, %s87
      %p96 = scmp.eq.s32.totalorder %s21, 1
      %p97 = por %p95, %p96
      %p98 = scmp.ne.s32.totalorder %s87, %s88
      %p99 = scmp.eq.s32.totalorder %s21, 0
      %p100 = por %p98, %p99
      %p101 = scmp.ne.s32.totalorder %s87, %s88
      %p102 = scmp.eq.s32.totalorder %s22, 1
      %p103 = por %p101, %p102
      %p105 = scmp.ne.s32.totalorder %s88, %s104
      %p106 = scmp.eq.s32.totalorder %s22, 0
      %p107 = por %p105, %p106
      %s108 = ssub.s32 %s25, %s41
      %p109 = scmp.eq.s32.totalorder %s108, 0
      %s111 = sadd.s32 %s110, 1
      %s112 = scalar_select %p109, %s110, %s111
      %p115 = pneg %p109
      %p116 = scmp.eq.s32.totalorder %s16, 1
      %p117 = por %p115, %p116
      %p118 = scmp.ne.s32.totalorder %s110, %s113
      %p119 = scmp.eq.s32.totalorder %s16, 0
      %p120 = por %p118, %p119
      %p121 = scmp.ne.s32.totalorder %s110, %s113
      %p122 = scmp.eq.s32.totalorder %s21, 1
      %p123 = por %p121, %p122
      %p124 = scmp.ne.s32.totalorder %s113, %s114
      %p125 = scmp.eq.s32.totalorder %s21, 0
      %p126 = por %p124, %p125
      %p127 = scmp.ne.s32.totalorder %s113, %s114
      %p128 = scmp.eq.s32.totalorder %s22, 1
      %p129 = por %p127, %p128
      %p131 = scmp.ne.s32.totalorder %s114, %s130
      %p132 = scmp.eq.s32.totalorder %s22, 0
      %p133 = por %p131, %p132
      %s134 = ssub.s32 %s23, %s49
      %s135 = ssub.s32 %s24, %s45
      %s136 = sor.u32 %s134, %s135
      %s137 = ssub.s32 %s25, %s41
      %s138 = sor.u32 %s136, %s137
      %p139 = scmp.eq.s32.totalorder %s138, 0
      %s141 = sadd.s32 %s140, 1
      %s142 = scalar_select %p139, %s140, %s141
      %p145 = pneg %p139
      %p146 = scmp.eq.s32.totalorder %s16, 1
      %p147 = por %p145, %p146
      %p148 = scmp.ne.s32.totalorder %s140, %s143
      %p149 = scmp.eq.s32.totalorder %s16, 0
      %p150 = por %p148, %p149
      %p151 = scmp.ne.s32.totalorder %s140, %s143
      %p152 = scmp.eq.s32.totalorder %s21, 1
      %p153 = por %p151, %p152
      %p154 = scmp.ne.s32.totalorder %s143, %s144
      %p155 = scmp.eq.s32.totalorder %s21, 0
      %p156 = por %p154, %p155
      %p157 = scmp.ne.s32.totalorder %s143, %s144
      %p158 = scmp.eq.s32.totalorder %s22, 1
      %p159 = por %p157, %p158
      %p161 = scmp.ne.s32.totalorder %s144, %s160
      %p162 = scmp.eq.s32.totalorder %s22, 0
      %p163 = por %p161, %p162
      %p164 = scmp.le.s32.totalorder 1, %s16
      %p165 = scmp.lt.s32.totalorder %s16, 3
      %p166 = pnand %p164, %p165
      %p167 = pneg %p166
      // Predicated region
      $region9: #{tpu_custom_call.1} parent=5 // pred_check
        _
      $region10: #{tpu_custom_call.1} parent=5 // pred_check_branch
        %169 = sbr.rel (%p166) target = $region12
      $region11: #{tpu_custom_call.1} parent=5 // pred_region
        %s170 = ssub.s32 %s16, 1
        // Predicated region
        $region13: #{tpu_custom_call.1} parent=11 // pred_check
          %p171 = pneg %p100
        $region14: #{tpu_custom_call.1} parent=11 // pred_check_branch
          %173 = sbr.rel (%p171) target = $region16
        $region15: #{tpu_custom_call.1} parent=11 // pred_region
          %s174 = smul.u32 4, %s30
          %176 = vsyncadd [#allocation7], 0
          %s177 = sadd.s32 %s29, %s174
          %s178 = smul.addr %s177, 8
          %s179 = scalar_lea.hbm %s1, %s178
          %s180 = sshll.u32 %s179, 4
          %s181 = int_to_ptr.hbm [resolvable:$true] %s180
          %s182 = sshll.u32 [#allocation6], 4
          %s183 = int_to_ptr.vmem [resolvable:$true] %s182
          %188 = dma.hbm_to_vmem [thread:$0]  %s181, 512, %s183, [#allocation7], 128, 128, 8
        $region16: #{tpu_custom_call.1} parent=11 // pred_fallthru
          _
        // Predicated region
        $region17: #{tpu_custom_call.1} parent=11 // pred_check
          %p189 = pneg %p126
        $region18: #{tpu_custom_call.1} parent=11 // pred_check_branch
          %191 = sbr.rel (%p189) target = $region20
        $region19: #{tpu_custom_call.1} parent=11 // pred_region
          %p192 = scmp.lt.s32.totalorder %s29, 0
          %s193 = scalar_select %p192, %s29, 0
          %s194 = scalar_lea.vmem %s2, %s193
        $region20: #{tpu_custom_call.1} parent=11 // pred_fallthru
          _
      $region12: #{tpu_custom_call.1} parent=5 // pred_fallthru
        _
      %p195 = scmp.lt.s32.totalorder %s16, 2
      // Predicated region
      $region21: #{tpu_custom_call.1} parent=5 // pred_check
        %p196 = pneg %p195
      $region22: #{tpu_custom_call.1} parent=5 // pred_check_branch
        %198 = sbr.rel (%p196) target = $region24
      $region23: #{tpu_custom_call.1} parent=5 // pred_region
        // Predicated region
        $region25: #{tpu_custom_call.1} parent=23 // pred_check
          %p199 = pneg %p66
        $region26: #{tpu_custom_call.1} parent=23 // pred_check_branch
          %201 = sbr.rel (%p199) target = $region28
        $region27: #{tpu_custom_call.1} parent=23 // pred_region
          %s202 = sand.u32 %s56, 1
          %s203 = scalar_lea.sflag [#allocation4], %s202
          %s204 = sand.u32 %s56, 1
          %s205 = smul.addr %s204, 8
          %s206 = scalar_lea.vmem [#allocation3], %s205
          %208 = vsyncadd %s203, 0
          %s209 = sadd.s32 %s26, %s24
          %s210 = sadd.s32 %s209, %s23
          %s211 = smul.addr %s210, 8
          %s212 = scalar_lea.hbm %s0, %s211
          %s214 = sshll.u32 %s212, 4
          %s215 = int_to_ptr.hbm [resolvable:$true] %s214
          %s216 = sshll.u32 %s206, 4
          %s217 = int_to_ptr.vmem [resolvable:$true] %s216
          %219 = dma.hbm_to_vmem [thread:$0]  %s215, 128, %s217, %s203
        $region28: #{tpu_custom_call.1} parent=23 // pred_fallthru
          _
      $region24: #{tpu_custom_call.1} parent=5 // pred_fallthru
        _
      %p220 = scmp.le.s32.totalorder 1, %s16
      %p221 = scmp.lt.s32.totalorder %s16, 3
      %p222 = pnand %p220, %p221
      %p223 = pneg %p222
      // Predicated region
      $region29: #{tpu_custom_call.1} parent=5 // pred_check
        _
      $region30: #{tpu_custom_call.1} parent=5 // pred_check_branch
        %225 = sbr.rel (%p222) target = $region32
      $region31: #{tpu_custom_call.1} parent=5 // pred_region
        %s226 = ssub.s32 %s16, 1
        %s227 = sand.u32 %s59, 1
        %s228 = scalar_lea.sflag [#allocation4], %s227
        %s229 = sand.u32 %s59, 1
        %s230 = smul.addr %s229, 8
        %s231 = scalar_lea.vmem [#allocation3], %s230
        // Predicated region
        $region33: #{tpu_custom_call.1} parent=31 // pred_check
          %p232 = pneg %p72
        $region34: #{tpu_custom_call.1} parent=31 // pred_check_branch
          %234 = sbr.rel (%p232) target = $region36
        $region35: #{tpu_custom_call.1} parent=31 // pred_region
          %236 = dma.done %s228, 128
        $region36: #{tpu_custom_call.1} parent=31 // pred_fallthru
          _
        // Predicated region
        $region37: #{tpu_custom_call.1} parent=31 // pred_check
          %p237 = pneg %p100
        $region38: #{tpu_custom_call.1} parent=31 // pred_check_branch
          %239 = sbr.rel (%p237) target = $region40
        $region39: #{tpu_custom_call.1} parent=31 // pred_region
          %241 = dma.done [#allocation7], 512
        $region40: #{tpu_custom_call.1} parent=31 // pred_fallthru
          _
        %s242 = sand.u32 %s59, 1
        %s243 = scalar_lea.sflag [#allocation4], %s242
        %s244 = sand.u32 %s59, 1
        %s245 = smul.addr %s244, 8
        %s246 = scalar_lea.vmem [#allocation3], %s245
        %p247 = pneg %p72
        %p248 = pneg %p69
        %p249 = pneg %p100
        %p250 = pneg %p97
        %p251 = scmp.lt.s32.totalorder %s29, 0
        %s252 = scalar_select %p251, %s29, 0
        %s253 = scalar_lea.vmem %s2, %s252
        %p254 = pneg %p126
        %p255 = pneg %p123
        %p256 = pneg %p156
        %p257 = pneg %p153
        %s258 = sand.u32 %s143, 1
        %s259 = scalar_lea.sflag [#allocation5], %s258
        %s260 = sand.u32 %s143, 1
        %s261 = smul.addr %s260, 8
        %s262 = scalar_lea.vmem [#allocation8], %s261
        %s263 = smul.u32 4, %s30
        %p264 = scmp.lt.s32.totalorder %s29, 0
        %s265 = scalar_select %p264, %s29, 0
        %s266 = scalar_lea.vmem %s2, %s265
        %p267 = scmp.eq.s32.totalorder %s30, 0
        // Predicated region
        $region41: #{tpu_custom_call.1} parent=31 // pred_check
          %p268 = pneg %p267
        $region42: #{tpu_custom_call.1} parent=31 // pred_check_branch
          %270 = sbr.rel (%p268) target = $region44
        $region43: #{tpu_custom_call.1} parent=31 // pred_region
          %vm271 = vcmask 785408
          %272 = vst.msk [vmem:[#allocation2] sm:$0xff] %vm271, 0.0
        $region44: #{tpu_custom_call.1} parent=31 // pred_fallthru
          _
        %v273 = vld [vmem:[#allocation2] sm:$0xff]
        %v274 = vld [vmem:[%s231] sm:$0xff]
        %v275 = vld [vmem:[#allocation6] sm:$0xff]
        %v276 = vld [vmem:[#allocation6 + $0x8] sm:$0xff]
        %v277 = vld [vmem:[#allocation6 + $0x10] sm:$0xff]
        %v278 = vld [vmem:[#allocation6 + $0x18] sm:$0xff]
        %vm279 = vcmask 261120
        %v281 = vsel %vm279, %v274, 0
        %283 = vmatpush.msra.mxu0 0.0
        %284 = vmatpush.msra.mxu0 0.0
        %285 = vmatpush.msra.mxu0 0.0
        %286 = vmatpush.msra.mxu0 0.0
        %287 = vmatpush.msra.mxu0 0.0
        %288 = vmatpush.msra.mxu0 0.0
        %289 = vmatpush.msra.mxu0 0.0
        %290 = vmatpush.msra.mxu0 0.0
        %291 = vmatpush.msra.mxu0 0.0
        %292 = vmatpush.msra.mxu0 0.0
        %293 = vmatpush.msra.mxu0 0.0
        %294 = vmatpush.msra.mxu0 0.0
        %295 = vmatpush.msra.mxu0 %v278
        %296 = vmatpush.msra.mxu0 %v277
        %297 = vmatpush.msra.mxu0 %v276
        %298 = vmatpush.msra.mxu0 %v275
        %299 = vmatmul.f32.gmra.mxu0 %v281
        %v300 = vpop.f32.mrf.mxu0
        %v301 = vadd.f32 0.0, %v300
        %302 = vdwg.mxu0
        %v303 = vadd.f32 %v273, %v301
        %vm304 = vcmask 785408
        %305 = vst.msk [vmem:[#allocation2] sm:$0xff] %vm304, %v303
        // Predicated region
        $region45: #{tpu_custom_call.1} parent=31 // pred_check
          %p306 = pneg %p267
        $region46: #{tpu_custom_call.1} parent=31 // pred_check_branch
          %308 = sbr.rel (%p306) target = $region48
        $region47: #{tpu_custom_call.1} parent=31 // pred_region
          %v309 = vld [vmem:[#allocation2] sm:$0xff]
          %v310 = vld [vmem:[%s266] sm:$0x1]
          %v312 = vperm.slane %v310, 0
          %v314 = vadd.f32 %v309, %v312
          %315 = vst.msk [vmem:[%s262] sm:$0xff] %vm304, %v314
        $region48: #{tpu_custom_call.1} parent=31 // pred_fallthru
          _
        %s316 = sand.u32 %s143, 1
        %s317 = scalar_lea.sflag [#allocation5], %s316
        %s318 = sand.u32 %s143, 1
        %s319 = smul.addr %s318, 8
        %s320 = scalar_lea.vmem [#allocation8], %s319
        // Predicated region
        $region49: #{tpu_custom_call.1} parent=31 // pred_check
          %p321 = pneg %p153
        $region50: #{tpu_custom_call.1} parent=31 // pred_check_branch
          %323 = sbr.rel (%p321) target = $region52
        $region51: #{tpu_custom_call.1} parent=31 // pred_region
          %325 = vsyncadd %s317, 0
          %s326 = sadd.s32 %s29, %s28
          %s327 = sadd.s32 %s326, %s27
          %s328 = smul.addr %s327, 8
          %s329 = scalar_lea.hbm %s3, %s328
          %s331 = sshll.u32 %s320, 4
          %s332 = int_to_ptr.vmem [resolvable:$true] %s331
          %s333 = sshll.u32 %s329, 4
          %s334 = int_to_ptr.hbm [resolvable:$true] %s333
          %336 = dma.vmem_to_hbm [thread:$0]  %s332, 128, %s334, %s317
        $region52: #{tpu_custom_call.1} parent=31 // pred_fallthru
          _
      $region32: #{tpu_custom_call.1} parent=5 // pred_fallthru
        _
      %p337 = scmp.le.s32.totalorder 2, %s16
      // Predicated region
      $region53: #{tpu_custom_call.1} parent=5 // pred_check
        %p338 = pneg %p337
      $region54: #{tpu_custom_call.1} parent=5 // pred_check_branch
        %340 = sbr.rel (%p338) target = $region56
      $region55: #{tpu_custom_call.1} parent=5 // pred_region
        %s341 = ssub.s32 %s16, 2
        // Predicated region
        $region57: #{tpu_custom_call.1} parent=55 // pred_check
          %p342 = pneg %p159
        $region58: #{tpu_custom_call.1} parent=55 // pred_check_branch
          %344 = sbr.rel (%p342) target = $region60
        $region59: #{tpu_custom_call.1} parent=55 // pred_region
          %s345 = sand.u32 %s144, 1
          %s346 = scalar_lea.sflag [#allocation5], %s345
          %s347 = sand.u32 %s144, 1
          %s348 = smul.addr %s347, 8
          %s349 = scalar_lea.vmem [#allocation8], %s348
          %351 = dma.done %s346, 128
        $region60: #{tpu_custom_call.1} parent=55 // pred_fallthru
          _
      $region56: #{tpu_custom_call.1} parent=5 // pred_fallthru
        _
    $region6: #{tpu_custom_call.1} parent=1 // loop_footer
      %s20 = sadd.s32 1, %s16
    $region7: #{tpu_custom_call.1} parent=1 // loop_footer_branch
      %15 = sbr.rel target = $region3
    $region8: #{tpu_custom_call.1} parent=1 // loop_exit
      _
    %352 = vsyncpa [#allocation4], 1
    %s353 = scalar_lea.sflag [#allocation4], 1
    %354 = vsyncpa %s353, 1
    %355 = vsyncpa [#allocation7], 1
    %356 = vsyncpa [#allocation5], 1
    %s357 = scalar_lea.sflag [#allocation5], 1
    %358 = vsyncpa %s357, 1

</llo_original>
